<compile_context>
chip_gen: v6e
topology: v6e:2x2x1
jax: 0.10.0
libtpu: 0.0.40
codegen_flags: <defaults>
</compile_context>

<pallas_src>
import math
import functools

import jax
import jax.numpy as jnp
import numpy as np
from jax import lax
from jax.experimental import pallas as pl
from jax.experimental.pallas import tpu as pltpu


# ---------------------------------------------------------------------------
# In-kernel helpers
# ---------------------------------------------------------------------------

def _erf(z):
    # Abramowitz & Stegun 7.1.26 (max abs err ~1.5e-7); exp/abs/where only so it lowers
    # cleanly through Mosaic. Used for torch's exact (erf-based) GELU.
    a1, a2, a3, a4, a5 = 0.254829592, -0.284496736, 1.421413741, -1.453152027, 1.061405429
    p = 0.3275911
    za = jnp.abs(z)
    t = 1.0 / (1.0 + p * za)
    poly = ((((a5 * t + a4) * t + a3) * t + a2) * t + a1) * t
    y = 1.0 - poly * jnp.exp(-za * za)
    return jnp.where(z >= 0, y, -y)


def _gelu_exact(x):
    return 0.5 * x * (1.0 + _erf(x * (1.0 / math.sqrt(2.0))))


def _layer_norm(x, gamma, beta, eps):
    mean = jnp.mean(x, axis=-1, keepdims=True)
    xc = x - mean
    var = jnp.mean(xc * xc, axis=-1, keepdims=True)
    inv = lax.rsqrt(var + eps)
    return xc * inv * gamma + beta


# ---------------------------------------------------------------------------
# Kernel 1: self-attention, grid = (batch, head); bf16 MXU operands, f32 softmax
# ---------------------------------------------------------------------------

def _attn_kernel(x_ref, w_ref, b_ref, bias_ref, *out_refs, head_dim, output_attentions):
    ctx_ref = out_refs[0]
    probs_ref = out_refs[1] if output_attentions else None
    D = head_dim

    x = x_ref[0]                                                    # (S, Hd) bf16
    w = w_ref[0]                                                    # (Hd, 3D) bf16, q cols pre-scaled by 1/sqrt(D)

    # Per-head QKV projection on the MXU (f32 accumulate), fused q/v bias add.
    qkv = jnp.dot(x, w, preferred_element_type=jnp.float32) + b_ref[0]      # (S, 3D) f32
    q = qkv[:, :D].astype(jnp.bfloat16)
    k = qkv[:, D:2 * D].astype(jnp.bfloat16)
    v = qkv[:, 2 * D:].astype(jnp.bfloat16)

    # q @ k^T without materializing a transposed copy of k; f32 scores.
    scores = lax.dot_general(q, k, (((1,), (1,)), ((), ())),
                             preferred_element_type=jnp.float32)            # (S, S)
    # Pre-summed rel_pos + rel_2d_pos with the attention mask already folded in as -inf.
    scores = scores + bias_ref[0, 0].astype(jnp.float32)

    # softmax over keys in f32 (matches torch softmax(dim=-1, dtype=float32)).
    m = jnp.max(scores, axis=-1, keepdims=True)
    e = jnp.exp(scores - m)
    denom = jnp.sum(e, axis=-1, keepdims=True)
    probs = e * pl.reciprocal(denom, approx=True)                   # EUP reciprocal, VPU multiply

    # TODO(synk): attention dropout omitted (eval-mode identity).

    ctx = jnp.dot(probs.astype(jnp.bfloat16), v,
                  preferred_element_type=jnp.float32)               # (S, D) f32 accum

    ctx_ref[0, 0] = ctx.astype(ctx_ref.dtype)                       # per-head (S, D) block, bf16
    if probs_ref is not None:
        probs_ref[0, 0] = probs.astype(probs_ref.dtype)


# ---------------------------------------------------------------------------
# Kernel 2: self-output dense + LN, intermediate dense + GELU, output dense + LN
# ---------------------------------------------------------------------------

def _ffn_kernel(ctx_ref, x_ref, wso_ref, bso_ref, g1_ref, b1_ref,
                wi_ref, bi_ref, wo_ref, bo_ref, g2_ref, b2_ref, out_ref, *, eps):
    ctx = ctx_ref[0]                                                # (ts, Hd) bf16
    x = x_ref[0]                                                    # (ts, Hd) f32 residual

    # LayoutLMv2SelfOutput: dense + dropout(identity) + LayerNorm(residual)
    so = jnp.dot(ctx, wso_ref[...], preferred_element_type=jnp.float32) + bso_ref[...]
    h1 = _layer_norm(so + x, g1_ref[...], b1_ref[...], eps)

    # LayoutLMv2Intermediate: dense + exact GELU
    inter = jnp.dot(h1.astype(jnp.bfloat16), wi_ref[...],
                    preferred_element_type=jnp.float32) + bi_ref[...]
    inter = _gelu_exact(inter)

    # LayoutLMv2Output: dense + dropout(identity) + LayerNorm(residual)
    # TODO(synk): spatial_position_embeddings add not wired (None in this test).
    out = jnp.dot(inter.astype(jnp.bfloat16), wo_ref[...],
                  preferred_element_type=jnp.float32) + bo_ref[...]
    out_ref[0] = _layer_norm(out + h1, g2_ref[...], b2_ref[...], eps)


# ---------------------------------------------------------------------------
# Wrapper
# ---------------------------------------------------------------------------

def layoutlmv2_layer(hidden_states, attention_mask, rel_pos, rel_2d_pos, params,
                     num_heads, *, layer_norm_eps=1e-12, output_attentions=True,
                     probs_dtype=jnp.float32, spatial_position_embeddings=None):
    """hidden_states: (B,S,Hd) f32; attention_mask: (B,1,1,S) with 1 = masked out;
    rel_pos / rel_2d_pos: (B,H,S,S); params: torch-layout weights (see __main__)."""
    assert spatial_position_embeddings is None  # TODO(synk): not supported in-kernel yet
    B, S, Hd = hidden_states.shape
    H = num_heads
    D = Hd // H
    I = params["w_i"].shape[0]
    scale = 1.0 / math.sqrt(D)
    f32, bf16 = jnp.float32, jnp.bfloat16

    # ---- attention operand prep (once per call, outside the grid) ----
    # nn.Linear: y = x @ W.T.  Reorganize to per-head (H, Hd, 3*D) with the q columns
    # pre-scaled by 1/sqrt(D); cast to bf16 once.
    wqkv_t = params["w_qkv"].T.astype(f32)                          # (Hd, 3Hd) = [q | k | v]

    def _per_head_cols(w):                                          # (Hd, Hd) -> (H, Hd, D)
        return w.reshape(Hd, H, D).transpose(1, 0, 2)

    w_heads = jnp.concatenate(
        [_per_head_cols(wqkv_t[:, :Hd] * scale),
         _per_head_cols(wqkv_t[:, Hd:2 * Hd]),
         _per_head_cols(wqkv_t[:, 2 * Hd:])], axis=-1).astype(bf16)  # (H, Hd, 3D)

    q_bias = params["q_bias"].reshape(H, D).astype(f32) * scale
    v_bias = params["v_bias"].reshape(H, D).astype(f32)
    b_heads = jnp.concatenate([q_bias, jnp.zeros((H, D), f32), v_bias],
                              axis=-1).reshape(H, 1, 3 * D)          # (H, 1, 3D) f32, k bias = 0

    # Pre-summed rel bias with the attention mask folded in (additive -inf), bf16 stream.
    mask = attention_mask.reshape(B, 1, 1, S).astype(bool)
    bias = jnp.where(mask, -jnp.inf, (rel_pos + rel_2d_pos).astype(f32)).astype(bf16)

    x_bf16 = hidden_states.astype(bf16)

    attn_kernel = functools.partial(_attn_kernel, head_dim=D,
                                    output_attentions=output_attentions)

    out_shape = [jax.ShapeDtypeStruct((B, H, S, D), bf16)]
    out_specs = [pl.BlockSpec((1, 1, S, D), lambda b, h: (b, h, 0, 0))]
    if output_attentions:
        out_shape.append(jax.ShapeDtypeStruct((B, H, S, S), probs_dtype))
        out_specs.append(pl.BlockSpec((1, 1, S, S), lambda b, h: (b, h, 0, 0)))

    attn_out = pl.pallas_call(
        attn_kernel,
        out_shape=tuple(out_shape),
        grid_spec=pltpu.PrefetchScalarGridSpec(
            num_scalar_prefetch=0,
            grid=(B, H),
            in_specs=[
                pl.BlockSpec((1, S, Hd), lambda b, h: (b, 0, 0)),        # hidden (bf16), invariant in h
                pl.BlockSpec((1, Hd, 3 * D), lambda b, h: (h, 0, 0)),    # per-head fused QKV weight (bf16)
                pl.BlockSpec((1, 1, 3 * D), lambda b, h: (h, 0, 0)),     # per-head q/v bias (f32)
                pl.BlockSpec((1, 1, S, S), lambda b, h: (b, h, 0, 0)),   # rel bias + mask (bf16)
            ],
            out_specs=tuple(out_specs),
        ),
        compiler_params=pltpu.CompilerParams(
            dimension_semantics=("parallel", "parallel"),
            vmem_limit_bytes=32 * 1024 * 1024),
    )(x_bf16, w_heads, b_heads, bias)

    if output_attentions:
        ctx_bhsd, probs = attn_out
    else:
        ctx_bhsd, probs = attn_out[0], None

    # Merge heads (B,H,S,D) -> (B,S,Hd) once in XLA (bf16, cheap vs. bias/probs streams).
    context = ctx_bhsd.transpose(0, 2, 1, 3).reshape(B, S, Hd)

    # ---- self-output + FFN operand prep (bf16 weights, f32 biases/LN params) ----
    w_so = params["w_so"].T.astype(bf16)                            # (Hd, Hd)
    b_so = params["b_so"].reshape(1, Hd).astype(f32)
    w_i = params["w_i"].T.astype(bf16)                              # (Hd, I)
    b_i = params["b_i"].reshape(1, I).astype(f32)
    w_o = params["w_o"].T.astype(bf16)                              # (I, Hd)
    b_o = params["b_o"].reshape(1, Hd).astype(f32)
    g1 = params["ln1_g"].reshape(1, Hd).astype(f32)
    b1 = params["ln1_b"].reshape(1, Hd).astype(f32)
    g2 = params["ln2_g"].reshape(1, Hd).astype(f32)
    b2 = params["ln2_b"].reshape(1, Hd).astype(f32)

    # Sequence tile for the FFN grid (second parallel axis; keeps activations small).
    ts = S if (S <= 256 or S % 256 != 0) else 256

    ffn_kernel = functools.partial(_ffn_kernel, eps=layer_norm_eps)

    layer_out = pl.pallas_call(
        ffn_kernel,
        out_shape=jax.ShapeDtypeStruct((B, S, Hd), jnp.float32),
        grid_spec=pltpu.PrefetchScalarGridSpec(
            num_scalar_prefetch=0,
            grid=(B, S // ts),
            in_specs=[
                pl.BlockSpec((1, ts, Hd), lambda b, s: (b, s, 0)),   # attention context (bf16)
                pl.BlockSpec((1, ts, Hd), lambda b, s: (b, s, 0)),   # residual hidden (f32)
                pl.BlockSpec((Hd, Hd), lambda b, s: (0, 0)),         # self-output dense W (bf16)
                pl.BlockSpec((1, Hd), lambda b, s: (0, 0)),          # self-output dense b
                pl.BlockSpec((1, Hd), lambda b, s: (0, 0)),          # LN1 gamma
                pl.BlockSpec((1, Hd), lambda b, s: (0, 0)),          # LN1 beta
                pl.BlockSpec((Hd, I), lambda b, s: (0, 0)),          # intermediate dense W (bf16)
                pl.BlockSpec((1, I), lambda b, s: (0, 0)),           # intermediate dense b
                pl.BlockSpec((I, Hd), lambda b, s: (0, 0)),          # output dense W (bf16)
                pl.BlockSpec((1, Hd), lambda b, s: (0, 0)),          # output dense b
                pl.BlockSpec((1, Hd), lambda b, s: (0, 0)),          # LN2 gamma
                pl.BlockSpec((1, Hd), lambda b, s: (0, 0)),          # LN2 beta
            ],
            out_specs=pl.BlockSpec((1, ts, Hd), lambda b, s: (b, s, 0)),
        ),
        compiler_params=pltpu.CompilerParams(
            dimension_semantics=("parallel", "parallel"),
            vmem_limit_bytes=40 * 1024 * 1024),
    )(context, hidden_states, w_so, b_so, g1, b1, w_i, b_i, w_o, b_o, g2, b2)

    return layer_out, probs


# ---------------------------------------------------------------------------
# Pure-JAX reference mirroring the PyTorch forward (fast_qkv=True, eval mode)
# ---------------------------------------------------------------------------

def _ln_ref(x, g, b, eps):
    mean = jnp.mean(x, axis=-1, keepdims=True)
    var = jnp.mean((x - mean) ** 2, axis=-1, keepdims=True)
    return (x - mean) / jnp.sqrt(var + eps) * g + b


def _reference(hidden, attention_mask, rel_pos, rel_2d_pos, params, H, eps=1e-12):
    B, S, Hd = hidden.shape
    D = Hd // H
    qkv = hidden @ params["w_qkv"].T
    q, k, v = jnp.split(qkv, 3, axis=-1)
    q = q + params["q_bias"]
    v = v + params["v_bias"]

    def t(x):
        return x.reshape(B, S, H, D).transpose(0, 2, 1, 3)

    q, k, v = t(q), t(k), t(v)
    q = q / math.sqrt(D)
    scores = q @ k.transpose(0, 1, 3, 2)
    scores = scores + rel_pos + rel_2d_pos
    scores = jnp.where(attention_mask.astype(bool), -jnp.inf, scores.astype(jnp.float32))
    probs = jax.nn.softmax(scores, axis=-1)
    ctx = (probs @ v).transpose(0, 2, 1, 3).reshape(B, S, Hd)

    so = ctx @ params["w_so"].T + params["b_so"]
    h1 = _ln_ref(so + hidden, params["ln1_g"], params["ln1_b"], eps)
    inter = jax.nn.gelu(h1 @ params["w_i"].T + params["b_i"], approximate=False)
    out = inter @ params["w_o"].T + params["b_o"]
    layer_out = _ln_ref(out + h1, params["ln2_g"], params["ln2_b"], eps)
    return layer_out, probs


if __name__ == "__main__":
    # toy config: hidden_size=32, num_attention_heads=4, intermediate_size=64,
    # fast_qkv=True, has_relative_attention_bias=True, has_spatial_attention_bias=True,
    # dropout=0 (eval), layer_norm_eps=1e-12.
    B, S, Hd, H, I = 2, 8, 32, 4, 64

    key = jax.random.PRNGKey(0)
    keys = jax.random.split(key, 16)

    hidden_states = jax.random.normal(keys[0], (B, S, Hd), dtype=jnp.float32)
    params = {
        "w_qkv": 0.05 * jax.random.normal(keys[1], (3 * Hd, Hd), dtype=jnp.float32),
        "q_bias": 0.1 * jax.random.normal(keys[2], (1, 1, Hd), dtype=jnp.float32),
        "v_bias": 0.1 * jax.random.normal(keys[3], (1, 1, Hd), dtype=jnp.float32),
        "w_so": 0.05 * jax.random.normal(keys[4], (Hd, Hd), dtype=jnp.float32),
        "b_so": 0.05 * jax.random.normal(keys[5], (Hd,), dtype=jnp.float32),
        "ln1_g": 1.0 + 0.05 * jax.random.normal(keys[6], (Hd,), dtype=jnp.float32),
        "ln1_b": 0.05 * jax.random.normal(keys[7], (Hd,), dtype=jnp.float32),
        "w_i": 0.05 * jax.random.normal(keys[8], (I, Hd), dtype=jnp.float32),
        "b_i": 0.05 * jax.random.normal(keys[9], (I,), dtype=jnp.float32),
        "w_o": 0.05 * jax.random.normal(keys[10], (Hd, I), dtype=jnp.float32),
        "b_o": 0.05 * jax.random.normal(keys[11], (Hd,), dtype=jnp.float32),
        "ln2_g": 1.0 + 0.05 * jax.random.normal(keys[12], (Hd,), dtype=jnp.float32),
        "ln2_b": 0.05 * jax.random.normal(keys[13], (Hd,), dtype=jnp.float32),
    }
    rel_pos = 0.1 * jax.random.normal(keys[14], (B, H, S, S), dtype=jnp.float32)
    rel_2d_pos = 0.1 * jax.random.normal(keys[15], (B, H, S, S), dtype=jnp.float32)

    # mask: 1 = masked out (torch masked_fill_ on mask.bool()). Mask last 2 keys of batch 1.
    mask_np = np.zeros((B, 1, 1, S), dtype=np.float32)
    mask_np[1, 0, 0, -2:] = 1.0
    attention_mask = jnp.asarray(mask_np)

    layer_out, probs = layoutlmv2_layer(
        hidden_states, attention_mask, rel_pos, rel_2d_pos, params, H,
        output_attentions=True)
    jax.block_until_ready((layer_out, probs))

    layer_ref, probs_ref = _reference(
        hidden_states, attention_mask, rel_pos, rel_2d_pos, params, H)

    # bf16 MXU operands + bf16 bias stream -> widened tolerances vs the f32 reference.
    np.testing.assert_allclose(np.asarray(probs, dtype=np.float32),
                               np.asarray(probs_ref), rtol=2e-2, atol=1e-2)
    np.testing.assert_allclose(np.asarray(layer_out), np.asarray(layer_ref),
                               rtol=2e-2, atol=2e-2)

    print("KERNEL_OK")
</pallas_src>

<mosaic_0001>
module attributes {stable_mosaic.version = 11 : i64} {
  func.func @_attn_kernel(%arg0: i32, %arg1: i32, %arg2: memref<1x8x32xbf16, #tpu.memory_space<vmem>>, %arg3: memref<1x32x24xbf16, #tpu.memory_space<vmem>>, %arg4: memref<1x1x24xf32, #tpu.memory_space<vmem>>, %arg5: memref<1x1x8x8xbf16, #tpu.memory_space<vmem>>, %arg6: memref<1x1x8x8xbf16, #tpu.memory_space<vmem>>, %arg7: memref<1x1x8x8xf32, #tpu.memory_space<vmem>>) attributes {dimension_semantics = [#tpu.dimension_semantics<parallel>, #tpu.dimension_semantics<parallel>], iteration_bounds = array<i64: 2, 4>, scalar_prefetch = 0 : i64, scratch_operands = 0 : i64, tpu.core_type = #tpu.core_type<tc>, window_params = [{transform_indices = @transform_0, window_bounds = array<i64: 1, 8, 32>}, {transform_indices = @transform_1, window_bounds = array<i64: 1, 32, 24>}, {transform_indices = @transform_2, window_bounds = array<i64: 1, 1, 24>}, {transform_indices = @transform_3, window_bounds = array<i64: 1, 1, 8, 8>}, {transform_indices = @transform_4, window_bounds = array<i64: 1, 1, 8, 8>}, {transform_indices = @transform_5, window_bounds = array<i64: 1, 1, 8, 8>}]} {
    %c0 = arith.constant 0 : index
    %c0_0 = arith.constant 0 : index
    %c0_1 = arith.constant 0 : index
    %0 = vector.load %arg2[%c0, %c0_0, %c0_1] : memref<1x8x32xbf16, #tpu.memory_space<vmem>>, vector<1x8x32xbf16>
    %1 = vector.shape_cast %0 : vector<1x8x32xbf16> to vector<8x32xbf16>
    %c0_2 = arith.constant 0 : index
    %c0_3 = arith.constant 0 : index
    %c0_4 = arith.constant 0 : index
    %2 = vector.load %arg3[%c0_2, %c0_3, %c0_4] : memref<1x32x24xbf16, #tpu.memory_space<vmem>>, vector<1x32x24xbf16>
    %3 = vector.shape_cast %2 : vector<1x32x24xbf16> to vector<32x24xbf16>
    %cst = arith.constant dense<0.000000e+00> : vector<8x24xf32>
    %4 = tpu.matmul %1, %3, %cst {dimension_numbers = #tpu.dot_dimension_numbers<[1], [0], [0], [1], [0, 0, 1, 1], [], []>} : vector<8x32xbf16>, vector<32x24xbf16>, vector<8x24xf32> -> vector<8x24xf32>
    %c0_5 = arith.constant 0 : index
    %c0_6 = arith.constant 0 : index
    %c0_7 = arith.constant 0 : index
    %5 = vector.load %arg4[%c0_5, %c0_6, %c0_7] : memref<1x1x24xf32, #tpu.memory_space<vmem>>, vector<1x1x24xf32>
    %6 = vector.shape_cast %5 : vector<1x1x24xf32> to vector<1x24xf32>
    %7 = vector.broadcast %6 : vector<1x24xf32> to vector<8x24xf32>
    %8 = arith.addf %4, %7 : vector<8x24xf32>
    %9 = vector.extract_strided_slice %8 {offsets = [0, 0], sizes = [8, 8], strides = [1, 1]} : vector<8x24xf32> to vector<8x8xf32>
    %10 = arith.truncf %9 : vector<8x8xf32> to vector<8x8xbf16>
    %11 = vector.extract_strided_slice %8 {offsets = [0, 8], sizes = [8, 8], strides = [1, 1]} : vector<8x24xf32> to vector<8x8xf32>
    %12 = arith.truncf %11 : vector<8x8xf32> to vector<8x8xbf16>
    %13 = vector.extract_strided_slice %8 {offsets = [0, 16], sizes = [8, 8], strides = [1, 1]} : vector<8x24xf32> to vector<8x8xf32>
    %14 = arith.truncf %13 : vector<8x8xf32> to vector<8x8xbf16>
    %cst_8 = arith.constant dense<0.000000e+00> : vector<8x8xf32>
    %15 = tpu.matmul %10, %12, %cst_8 {dimension_numbers = #tpu.dot_dimension_numbers<[1], [1], [0], [0], [0, 0, 1, 0], [], []>} : vector<8x8xbf16>, vector<8x8xbf16>, vector<8x8xf32> -> vector<8x8xf32>
    %c0_9 = arith.constant 0 : index
    %c0_10 = arith.constant 0 : index
    %c0_11 = arith.constant 0 : index
    %c0_12 = arith.constant 0 : index
    %16 = vector.load %arg5[%c0_9, %c0_10, %c0_11, %c0_12] : memref<1x1x8x8xbf16, #tpu.memory_space<vmem>>, vector<1x1x8x8xbf16>
    %17 = vector.shape_cast %16 : vector<1x1x8x8xbf16> to vector<8x8xbf16>
    %18 = arith.extf %17 : vector<8x8xbf16> to vector<8x8xf32>
    %19 = arith.addf %15, %18 : vector<8x8xf32>
    %cst_13 = arith.constant dense<0xFF800000> : vector<8xf32>
    %20 = vector.multi_reduction <maximumf>, %19, %cst_13 [1] : vector<8x8xf32> to vector<8xf32>
    %21 = vector.shape_cast %20 : vector<8xf32> to vector<8x1xf32>
    %22 = vector.broadcast %21 : vector<8x1xf32> to vector<8x8xf32>
    %23 = arith.subf %19, %22 : vector<8x8xf32>
    %24 = math.exp %23 : vector<8x8xf32>
    %cst_14 = arith.constant dense<0.000000e+00> : vector<8xf32>
    %25 = vector.multi_reduction <add>, %24, %cst_14 [1] : vector<8x8xf32> to vector<8xf32>
    %26 = vector.shape_cast %25 : vector<8xf32> to vector<8x1xf32>
    %27 = tpu.reciprocal %26 {approx = true} : vector<8x1xf32> -> vector<8x1xf32>
    %28 = vector.broadcast %27 : vector<8x1xf32> to vector<8x8xf32>
    %29 = arith.mulf %24, %28 : vector<8x8xf32>
    %30 = arith.truncf %29 : vector<8x8xf32> to vector<8x8xbf16>
    %cst_15 = arith.constant dense<0.000000e+00> : vector<8x8xf32>
    %31 = tpu.matmul %30, %14, %cst_15 {dimension_numbers = #tpu.dot_dimension_numbers<[1], [0], [0], [1], [0, 0, 1, 1], [], []>} : vector<8x8xbf16>, vector<8x8xbf16>, vector<8x8xf32> -> vector<8x8xf32>
    %32 = arith.truncf %31 : vector<8x8xf32> to vector<8x8xbf16>
    %c0_16 = arith.constant 0 : index
    %c0_17 = arith.constant 0 : index
    %c0_18 = arith.constant 0 : index
    %c0_19 = arith.constant 0 : index
    %33 = vector.load %arg6[%c0_16, %c0_17, %c0_18, %c0_19] : memref<1x1x8x8xbf16, #tpu.memory_space<vmem>>, vector<1x1x8x8xbf16>
    %34 = vector.shape_cast %33 : vector<1x1x8x8xbf16> to vector<8x8xbf16>
    %35 = vector.shape_cast %32 : vector<8x8xbf16> to vector<1x1x8x8xbf16>
    tpu.vector_store %arg6[%c0_16, %c0_17, %c0_18, %c0_19], %35 {strides = array<i32>} : memref<1x1x8x8xbf16, #tpu.memory_space<vmem>>, vector<1x1x8x8xbf16>,
    %c0_20 = arith.constant 0 : index
    %c0_21 = arith.constant 0 : index
    %c0_22 = arith.constant 0 : index
    %c0_23 = arith.constant 0 : index
    %36 = vector.load %arg7[%c0_20, %c0_21, %c0_22, %c0_23] : memref<1x1x8x8xf32, #tpu.memory_space<vmem>>, vector<1x1x8x8xf32>
    %37 = vector.shape_cast %36 : vector<1x1x8x8xf32> to vector<8x8xf32>
    %38 = vector.shape_cast %29 : vector<8x8xf32> to vector<1x1x8x8xf32>
    tpu.vector_store %arg7[%c0_20, %c0_21, %c0_22, %c0_23], %38 {strides = array<i32>} : memref<1x1x8x8xf32, #tpu.memory_space<vmem>>, vector<1x1x8x8xf32>,
    return
  }
  func.func @transform_0(%arg0: i32, %arg1: i32) -> (i32, i32, i32) {
    %c0_i32 = arith.constant 0 : i32
    %c0_i32_0 = arith.constant 0 : i32
    %c0_i32_1 = arith.constant 0 : i32
    return %arg0, %c0_i32, %c0_i32_0 : i32, i32, i32
  }
  func.func @transform_1(%arg0: i32, %arg1: i32) -> (i32, i32, i32) {
    %c0_i32 = arith.constant 0 : i32
    %c0_i32_0 = arith.constant 0 : i32
    %c0_i32_1 = arith.constant 0 : i32
    return %arg1, %c0_i32, %c0_i32_0 : i32, i32, i32
  }
  func.func @transform_2(%arg0: i32, %arg1: i32) -> (i32, i32, i32) {
    %c0_i32 = arith.constant 0 : i32
    %c0_i32_0 = arith.constant 0 : i32
    %c0_i32_1 = arith.constant 0 : i32
    return %arg1, %c0_i32, %c0_i32_0 : i32, i32, i32
  }
  func.func @transform_3(%arg0: i32, %arg1: i32) -> (i32, i32, i32, i32) {
    %c0_i32 = arith.constant 0 : i32
    %c0_i32_0 = arith.constant 0 : i32
    %c0_i32_1 = arith.constant 0 : i32
    return %arg0, %arg1, %c0_i32, %c0_i32_0 : i32, i32, i32, i32
  }
  func.func @transform_4(%arg0: i32, %arg1: i32) -> (i32, i32, i32, i32) {
    %c0_i32 = arith.constant 0 : i32
    %c0_i32_0 = arith.constant 0 : i32
    %c0_i32_1 = arith.constant 0 : i32
    return %arg0, %arg1, %c0_i32, %c0_i32_0 : i32, i32, i32, i32
  }
  func.func @transform_5(%arg0: i32, %arg1: i32) -> (i32, i32, i32, i32) {
    %c0_i32 = arith.constant 0 : i32
    %c0_i32_0 = arith.constant 0 : i32
    %c0_i32_1 = arith.constant 0 : i32
    return %arg0, %arg1, %c0_i32, %c0_i32_0 : i32, i32, i32, i32
  }
}

</mosaic_0001>

<llo_original>
// kernel: tpu_custom_call.1
$region0: #{tpu_custom_call.1}
  #allocation0 [shape = 'u32[]', space=smem, size = 0x4, offset = 0x4, fixed_abs, tag = 'smem constant byte address 0x4 - core index']
  #allocation1 [shape = 'u32[144,128]{1,0:T(1,128)}', space=vmem, size = 0x12000, scoped, tag = 'internal scratch']
  %s0 = inlined_call_operand.vmem [shape: bf16[2,8,32], index: 0, kind: input, shape index: {}]
  %s1 = inlined_call_operand.vmem [shape: bf16[4,32,24], index: 1, kind: input, shape index: {}]
  %s2 = inlined_call_operand.vmem [shape: f32[4,1,24], index: 2, kind: input, shape index: {}]
  %s3 = inlined_call_operand.vmem [shape: bf16[2,4,8,8], index: 3, kind: input, shape index: {}]
  %s4 = inlined_call_operand.hbm [shape: bf16[2,4,8,8], index: 4, kind: output, shape index: {0}]
  %s5 = inlined_call_operand.hbm [shape: f32[2,4,8,8], index: 5, kind: output, shape index: {1}]
  %6 = xla_tuple %s4, %s5
  %s7 = sld [smem:[#allocation0]]
  $region57: #{tpu_custom_call.1} parent=0
    _
  %s9 = ssub.s32 1, %s7
  %s10 = scalar_select 0, %s9, %s7
  $region1: #{tpu_custom_call.1} parent=0
    #allocation2 [shape = 'u8[4096]{0}', space=vmem, size = 0x1000, scoped, tag = 'output window, operand 0']
    #allocation3 [shape = 's32[2]{0}', space=sflag, size = 0x8, scoped, tag = 'scoped memory for tpu_custom_call.1']
    #allocation4 [shape = 'u8[8192]{0}', space=vmem, size = 0x2000, scoped, tag = 'output window, operand 1']
    #allocation5 [shape = 's32[2]{0}', space=sflag, size = 0x8, scoped, tag = 'scoped memory for tpu_custom_call.1']
    %11 = vsyncpa [#allocation3], 0
    %s12 = scalar_lea.sflag [#allocation3], 1
    %13 = vsyncpa %s12, 0
    %14 = vsyncpa [#allocation5], 0
    %s15 = scalar_lea.sflag [#allocation5], 1
    %16 = vsyncpa %s15, 0
    loop: start=0, step=1, limit=10
    $region2: #{tpu_custom_call.1} parent=1 // loop_pre_header
      _
    $region3: #{tpu_custom_call.1} parent=1 // loop_header
      %s18 = sphi 0, %s22
      %p19 = scmp.ge.s32.totalorder %s18, 10
      %s25 = sphi 0, %s37
      %s26 = sphi 0, %s33
      %s27 = sphi 0, %s25
      %s28 = sphi 0, %s26
      %s29 = sphi 0, %s27
      %s30 = sphi 0, %s28
      %s40 = sphi 0, %s42
      %s43 = sphi 0, %s40
      %s44 = sphi 0, %s43
      %s60 = sphi 0, %s44
      %s66 = sphi 0, %s68
      %s69 = sphi 0, %s66
      %s70 = sphi 0, %s69
      %s86 = sphi 0, %s70
      %s92 = sphi 0, %s94
      %s95 = sphi 0, %s92
      %s96 = sphi 0, %s95
      %s112 = sphi 0, %s96
      %s120 = sphi 0, %s122
      %s123 = sphi 0, %s120
      %s124 = sphi 0, %s123
      %s140 = sphi 0, %s124
      %s148 = sphi 0, %s150
      %s151 = sphi 0, %s148
      %s152 = sphi 0, %s151
      %s168 = sphi 0, %s152
      %s176 = sphi 0, %s178
      %s179 = sphi 0, %s176
      %s180 = sphi 0, %s179
      %s196 = sphi 0, %s180
    $region4: #{tpu_custom_call.1} parent=1 // loop_header_branch
      %21 = sbr.rel (%p19) target = $region8
    $region5: #{tpu_custom_call.1} parent=1 // loop_body
      %s23 = ssub.s32 %s18, 1
      %s24 = ssub.s32 %s18, 2
      %s31 = sadd.s32 1, %s26
      %p32 = scmp.ge.s32.totalorder %s31, 4
      %s33 = scalar_select %p32, 0, %s31
      %s34 = sadd.s32 1, %s25
      %s35 = scalar_select %p32, %s34, %s25
      %p36 = scmp.ge.s32.totalorder %s35, 2
      %s37 = scalar_select %p36, 0, %s35
      %s38 = ssub.s32 %s25, %s37
      %p39 = scmp.eq.s32.totalorder %s38, 0
      %s41 = sadd.s32 %s40, 1
      %s42 = scalar_select %p39, %s40, %s41
      %p45 = pneg %p39
      %p46 = scmp.eq.s32.totalorder %s18, 7
      %p47 = por %p45, %p46
      %p48 = scmp.ne.s32.totalorder %s40, %s43
      %p49 = scmp.eq.s32.totalorder %s18, 0
      %p50 = por %p48, %p49
      %p51 = scmp.ne.s32.totalorder %s40, %s43
      %p52 = scmp.eq.s32.totalorder %s23, 7
      %p53 = por %p51, %p52
      %p54 = scmp.ne.s32.totalorder %s43, %s44
      %p55 = scmp.eq.s32.totalorder %s23, 0
      %p56 = por %p54, %p55
      %p57 = scmp.ne.s32.totalorder %s43, %s44
      %p58 = scmp.eq.s32.totalorder %s24, 7
      %p59 = por %p57, %p58
      %p61 = scmp.ne.s32.totalorder %s44, %s60
      %p62 = scmp.eq.s32.totalorder %s24, 0
      %p63 = por %p61, %p62
      %s64 = ssub.s32 %s26, %s33
      %p65 = scmp.eq.s32.totalorder %s64, 0
      %s67 = sadd.s32 %s66, 1
      %s68 = scalar_select %p65, %s66, %s67
      %p71 = pneg %p65
      %p72 = scmp.eq.s32.totalorder %s18, 7
      %p73 = por %p71, %p72
      %p74 = scmp.ne.s32.totalorder %s66, %s69
      %p75 = scmp.eq.s32.totalorder %s18, 0
      %p76 = por %p74, %p75
      %p77 = scmp.ne.s32.totalorder %s66, %s69
      %p78 = scmp.eq.s32.totalorder %s23, 7
      %p79 = por %p77, %p78
      %p80 = scmp.ne.s32.totalorder %s69, %s70
      %p81 = scmp.eq.s32.totalorder %s23, 0
      %p82 = por %p80, %p81
      %p83 = scmp.ne.s32.totalorder %s69, %s70
      %p84 = scmp.eq.s32.totalorder %s24, 7
      %p85 = por %p83, %p84
      %p87 = scmp.ne.s32.totalorder %s70, %s86
      %p88 = scmp.eq.s32.totalorder %s24, 0
      %p89 = por %p87, %p88
      %s90 = ssub.s32 %s26, %s33
      %p91 = scmp.eq.s32.totalorder %s90, 0
      %s93 = sadd.s32 %s92, 1
      %s94 = scalar_select %p91, %s92, %s93
      %p97 = pneg %p91
      %p98 = scmp.eq.s32.totalorder %s18, 7
      %p99 = por %p97, %p98
      %p100 = scmp.ne.s32.totalorder %s92, %s95
      %p101 = scmp.eq.s32.totalorder %s18, 0
      %p102 = por %p100, %p101
      %p103 = scmp.ne.s32.totalorder %s92, %s95
      %p104 = scmp.eq.s32.totalorder %s23, 7
      %p105 = por %p103, %p104
      %p106 = scmp.ne.s32.totalorder %s95, %s96
      %p107 = scmp.eq.s32.totalorder %s23, 0
      %p108 = por %p106, %p107
      %p109 = scmp.ne.s32.totalorder %s95, %s96
      %p110 = scmp.eq.s32.totalorder %s24, 7
      %p111 = por %p109, %p110
      %p113 = scmp.ne.s32.totalorder %s96, %s112
      %p114 = scmp.eq.s32.totalorder %s24, 0
      %p115 = por %p113, %p114
      %s116 = ssub.s32 %s25, %s37
      %s117 = ssub.s32 %s26, %s33
      %s118 = sor.u32 %s116, %s117
      %p119 = scmp.eq.s32.totalorder %s118, 0
      %s121 = sadd.s32 %s120, 1
      %s122 = scalar_select %p119, %s120, %s121
      %p125 = pneg %p119
      %p126 = scmp.eq.s32.totalorder %s18, 7
      %p127 = por %p125, %p126
      %p128 = scmp.ne.s32.totalorder %s120, %s123
      %p129 = scmp.eq.s32.totalorder %s18, 0
      %p130 = por %p128, %p129
      %p131 = scmp.ne.s32.totalorder %s120, %s123
      %p132 = scmp.eq.s32.totalorder %s23, 7
      %p133 = por %p131, %p132
      %p134 = scmp.ne.s32.totalorder %s123, %s124
      %p135 = scmp.eq.s32.totalorder %s23, 0
      %p136 = por %p134, %p135
      %p137 = scmp.ne.s32.totalorder %s123, %s124
      %p138 = scmp.eq.s32.totalorder %s24, 7
      %p139 = por %p137, %p138
      %p141 = scmp.ne.s32.totalorder %s124, %s140
      %p142 = scmp.eq.s32.totalorder %s24, 0
      %p143 = por %p141, %p142
      %s144 = ssub.s32 %s25, %s37
      %s145 = ssub.s32 %s26, %s33
      %s146 = sor.u32 %s144, %s145
      %p147 = scmp.eq.s32.totalorder %s146, 0
      %s149 = sadd.s32 %s148, 1
      %s150 = scalar_select %p147, %s148, %s149
      %p153 = pneg %p147
      %p154 = scmp.eq.s32.totalorder %s18, 7
      %p155 = por %p153, %p154
      %p156 = scmp.ne.s32.totalorder %s148, %s151
      %p157 = scmp.eq.s32.totalorder %s18, 0
      %p158 = por %p156, %p157
      %p159 = scmp.ne.s32.totalorder %s148, %s151
      %p160 = scmp.eq.s32.totalorder %s23, 7
      %p161 = por %p159, %p160
      %p162 = scmp.ne.s32.totalorder %s151, %s152
      %p163 = scmp.eq.s32.totalorder %s23, 0
      %p164 = por %p162, %p163
      %p165 = scmp.ne.s32.totalorder %s151, %s152
      %p166 = scmp.eq.s32.totalorder %s24, 7
      %p167 = por %p165, %p166
      %p169 = scmp.ne.s32.totalorder %s152, %s168
      %p170 = scmp.eq.s32.totalorder %s24, 0
      %p171 = por %p169, %p170
      %s172 = ssub.s32 %s25, %s37
      %s173 = ssub.s32 %s26, %s33
      %s174 = sor.u32 %s172, %s173
      %p175 = scmp.eq.s32.totalorder %s174, 0
      %s177 = sadd.s32 %s176, 1
      %s178 = scalar_select %p175, %s176, %s177
      %p181 = pneg %p175
      %p182 = scmp.eq.s32.totalorder %s18, 7
      %p183 = por %p181, %p182
      %p184 = scmp.ne.s32.totalorder %s176, %s179
      %p185 = scmp.eq.s32.totalorder %s18, 0
      %p186 = por %p184, %p185
      %p187 = scmp.ne.s32.totalorder %s176, %s179
      %p188 = scmp.eq.s32.totalorder %s23, 7
      %p189 = por %p187, %p188
      %p190 = scmp.ne.s32.totalorder %s179, %s180
      %p191 = scmp.eq.s32.totalorder %s23, 0
      %p192 = por %p190, %p191
      %p193 = scmp.ne.s32.totalorder %s179, %s180
      %p194 = scmp.eq.s32.totalorder %s24, 7
      %p195 = por %p193, %p194
      %p197 = scmp.ne.s32.totalorder %s180, %s196
      %p198 = scmp.eq.s32.totalorder %s24, 0
      %p199 = por %p197, %p198
      %p200 = scmp.le.s32.totalorder 1, %s18
      %p201 = scmp.lt.s32.totalorder %s18, 9
      %p202 = pnand %p200, %p201
      %p203 = pneg %p202
      // Predicated region
      $region9: #{tpu_custom_call.1} parent=5 // pred_check
        _
      $region10: #{tpu_custom_call.1} parent=5 // pred_check_branch
        %205 = sbr.rel (%p202) target = $region12
      $region11: #{tpu_custom_call.1} parent=5 // pred_region
        %s206 = ssub.s32 %s18, 1
      $region12: #{tpu_custom_call.1} parent=5 // pred_fallthru
        _
      %p207 = scmp.lt.s32.totalorder %s18, 8
      // Predicated region
      $region13: #{tpu_custom_call.1} parent=5 // pred_check
        %p208 = pneg %p207
      $region14: #{tpu_custom_call.1} parent=5 // pred_check_branch
        %210 = sbr.rel (%p208) target = $region16
      $region15: #{tpu_custom_call.1} parent=5 // pred_region
        // Predicated region
        $region17: #{tpu_custom_call.1} parent=15 // pred_check
          %p211 = pneg %p50
        $region18: #{tpu_custom_call.1} parent=15 // pred_check_branch
          %213 = sbr.rel (%p211) target = $region20
        $region19: #{tpu_custom_call.1} parent=15 // pred_region
          %p214 = scmp.lt.s32.totalorder %s25, 1
          %s215 = scalar_select %p214, %s25, 1
          %s216 = smul.addr %s215, 4
          %s217 = scalar_lea.vmem %s0, %s216
        $region20: #{tpu_custom_call.1} parent=15 // pred_fallthru
          _
        // Predicated region
        $region21: #{tpu_custom_call.1} parent=15 // pred_check
          %p218 = pneg %p76
        $region22: #{tpu_custom_call.1} parent=15 // pred_check_branch
          %220 = sbr.rel (%p218) target = $region24
        $region23: #{tpu_custom_call.1} parent=15 // pred_region
          %p221 = scmp.lt.s32.totalorder %s26, 3
          %s222 = scalar_select %p221, %s26, 3
          %s223 = smul.addr %s222, 4
          %s224 = smul.addr %s223, 4
          %s225 = scalar_lea.vmem %s1, %s224
        $region24: #{tpu_custom_call.1} parent=15 // pred_fallthru
          _
        // Predicated region
        $region25: #{tpu_custom_call.1} parent=15 // pred_check
          %p226 = pneg %p102
        $region26: #{tpu_custom_call.1} parent=15 // pred_check_branch
          %228 = sbr.rel (%p226) target = $region28
        $region27: #{tpu_custom_call.1} parent=15 // pred_region
          %p229 = scmp.lt.s32.totalorder %s26, 3
          %s230 = scalar_select %p229, %s26, 3
          %s231 = scalar_lea.vmem %s2, %s230
        $region28: #{tpu_custom_call.1} parent=15 // pred_fallthru
          _
        // Predicated region
        $region29: #{tpu_custom_call.1} parent=15 // pred_check
          %p232 = pneg %p130
        $region30: #{tpu_custom_call.1} parent=15 // pred_check_branch
          %234 = sbr.rel (%p232) target = $region32
        $region31: #{tpu_custom_call.1} parent=15 // pred_region
          %p235 = scmp.lt.s32.totalorder %s25, 1
          %s236 = scalar_select %p235, %s25, 1
          %p237 = scmp.lt.s32.totalorder %s26, 3
          %s238 = scalar_select %p237, %s26, 3
          %s239 = smul.addr %s236, 4
          %s240 = sadd.s32 %s238, %s239
          %s241 = smul.addr %s240, 4
          %s242 = scalar_lea.vmem %s3, %s241
        $region32: #{tpu_custom_call.1} parent=15 // pred_fallthru
          _
      $region16: #{tpu_custom_call.1} parent=5 // pred_fallthru
        _
      %p243 = scmp.le.s32.totalorder 1, %s18
      %p244 = scmp.lt.s32.totalorder %s18, 9
      %p245 = pnand %p243, %p244
      %p246 = pneg %p245
      // Predicated region
      $region33: #{tpu_custom_call.1} parent=5 // pred_check
        _
      $region34: #{tpu_custom_call.1} parent=5 // pred_check_branch
        %248 = sbr.rel (%p245) target = $region36
      $region35: #{tpu_custom_call.1} parent=5 // pred_region
        %s249 = ssub.s32 %s18, 1
        %p250 = scmp.lt.s32.totalorder %s27, 1
        %s251 = scalar_select %p250, %s27, 1
        %s252 = smul.addr %s251, 4
        %s253 = scalar_lea.vmem %s0, %s252
        %p254 = pneg %p56
        %p255 = pneg %p53
        %p256 = scmp.lt.s32.totalorder %s28, 3
        %s257 = scalar_select %p256, %s28, 3
        %s258 = smul.addr %s257, 4
        %s259 = smul.addr %s258, 4
        %s260 = scalar_lea.vmem %s1, %s259
        %p261 = pneg %p82
        %p262 = pneg %p79
        %p263 = scmp.lt.s32.totalorder %s28, 3
        %s264 = scalar_select %p263, %s28, 3
        %s265 = scalar_lea.vmem %s2, %s264
        %p266 = pneg %p108
        %p267 = pneg %p105
        %p268 = scmp.lt.s32.totalorder %s27, 1
        %s269 = scalar_select %p268, %s27, 1
        %p270 = scmp.lt.s32.totalorder %s28, 3
        %s271 = scalar_select %p270, %s28, 3
        %s272 = smul.addr %s269, 4
        %s273 = sadd.s32 %s271, %s272
        %s274 = smul.addr %s273, 4
        %s275 = scalar_lea.vmem %s3, %s274
        %p276 = pneg %p136
        %p277 = pneg %p133
        %p278 = pneg %p164
        %p279 = pneg %p161
        %s280 = sand.u32 %s151, 1
        %s281 = scalar_lea.sflag [#allocation3], %s280
        %s282 = sand.u32 %s151, 1
        %s283 = smul.addr %s282, 4
        %s284 = scalar_lea.vmem [#allocation2], %s283
        %p285 = pneg %p192
        %p286 = pneg %p189
        %s287 = sand.u32 %s179, 1
        %s288 = scalar_lea.sflag [#allocation5], %s287
        %s289 = sand.u32 %s179, 1
        %s290 = smul.addr %s289, 8
        %s291 = scalar_lea.vmem [#allocation4], %s290
        %p292 = scmp.lt.s32.totalorder %s27, 1
        %s293 = scalar_select %p292, %s27, 1
        %s294 = smul.addr %s293, 4
        %s295 = scalar_lea.vmem %s0, %s294
        %p296 = scmp.lt.s32.totalorder %s28, 3
        %s297 = scalar_select %p296, %s28, 3
        %s298 = smul.addr %s297, 4
        %s299 = smul.addr %s298, 4
        %s300 = scalar_lea.vmem %s1, %s299
        %p301 = scmp.lt.s32.totalorder %s28, 3
        %s302 = scalar_select %p301, %s28, 3
        %s303 = scalar_lea.vmem %s2, %s302
        %p304 = scmp.lt.s32.totalorder %s27, 1
        %s305 = scalar_select %p304, %s27, 1
        %p306 = scmp.lt.s32.totalorder %s28, 3
        %s307 = scalar_select %p306, %s28, 3
        %s308 = smul.addr %s305, 4
        %s309 = sadd.s32 %s307, %s308
        %s310 = smul.addr %s309, 4
        %s311 = scalar_lea.vmem %s3, %s310
        %v313 = vld [vmem:[%s295] sm:$0xf]
        %v314 = vld [vmem:[%s300] sm:$0xf]
        %v315 = vld [vmem:[%s300 + $0x4] sm:$0xf]
        %v316 = vld [vmem:[%s300 + $0x8] sm:$0xf]
        %v317 = vld [vmem:[%s300 + $0xc] sm:$0xf]
        %v318 = vld [vmem:[%s303] sm:$0x1]
        %v320 = vlaneseq
        %v321 = vshrl.u32 %v320, 7
        %v322 = vsub.s32 0, %v321
        %v323 = vrot.slane %v318, %v322
        %v329 = vunpack.c.l.b16 %v314
        %v330 = vunpack.c.l.b16 %v315
        %v331 = vunpack.c.l.b16 %v316
        %v332 = vunpack.c.l.b16 %v317
        %v333 = vpack.c.b16 %v330, %v329
        %v334 = vpack.c.b16 %v332, %v331
        %vm337 = vcmask 261120
        %v339 = vsel %vm337, %v313, 0
        %341 = vmatprep.subr.bf16.mxu0 0
        %342 = vmatpush1.bf16.msra.mxu0 0
        %343 = vmatprep.subr.bf16.mxu0 0
        %344 = vmatpush1.bf16.msra.mxu0 0
        %345 = vmatprep.subr.bf16.mxu0 0
        %346 = vmatpush1.bf16.msra.mxu0 0
        %347 = vmatprep.subr.bf16.mxu0 0
        %348 = vmatpush1.bf16.msra.mxu0 0
        %349 = vmatprep.subr.bf16.mxu0 0
        %350 = vmatpush1.bf16.msra.mxu0 0
        %351 = vmatprep.subr.bf16.mxu0 0
        %352 = vmatpush1.bf16.msra.mxu0 0
        %353 = vmatprep.subr.bf16.mxu0 0
        %354 = vmatpush1.bf16.msra.mxu0 %v334
        %355 = vmatprep.subr.bf16.mxu0 0
        %356 = vmatpush1.bf16.msra.mxu0 %v333
        %357 = vmatprep.subr.bf16.mxu0 0
        %358 = vmatpush2.bf16.msra.mxu0 0
        %359 = vmatprep.subr.bf16.mxu0 0
        %360 = vmatpush2.bf16.msra.mxu0 0
        %361 = vmatprep.subr.bf16.mxu0 0
        %362 = vmatpush2.bf16.msra.mxu0 0
        %363 = vmatprep.subr.bf16.mxu0 0
        %364 = vmatpush2.bf16.msra.mxu0 0
        %365 = vmatprep.subr.bf16.mxu0 0
        %366 = vmatpush2.bf16.msra.mxu0 0
        %367 = vmatprep.subr.bf16.mxu0 0
        %368 = vmatpush2.bf16.msra.mxu0 0
        %369 = vmatprep.subr.bf16.mxu0 0
        %370 = vmatpush2.bf16.msra.mxu0 0
        %371 = vmatprep.subr.bf16.mxu0 0
        %372 = vmatpush2.bf16.msra.mxu0 0
        %373 = vmatprep.mubr.bf16.mxu0 0
        %374 = vmatmul.mubr.bf16.gmra.mxu0 %v339
        %v375 = vpop.f32.mrf.mxu0
        %v376 = vadd.f32 %v323, %v375
        %v377 = vpop.f32.mrf.mxu0
        %v378 = vpop.f32.mrf.mxu0
        %v379 = vpop.f32.mrf.mxu0
        %380 = vdwg.mxu0
        %v381 = vpack.c.bf16 %v376, %v376
        %v382 = vld [vmem:[%s311] sm:$0xf]
        %v383 = vunpack.c.l.bf16 %v382
        %385 = vrot.lane.b32.xlu0 %v381, 120
        %v386 = vpop.permute.xlu0 %385
        %vm387 = vcmask 64512
        %v389 = vsel %vm387, %v381, 0
        %v392 = vsel %vm387, %v386, 0
        %394 = vmatprep.subr.bf16.mxu0 0
        %395 = vmatpush1.bf16.xpose.msra.mxu0 0
        %396 = vmatprep.subr.bf16.mxu0 0
        %397 = vmatpush1.bf16.xpose.msra.mxu0 0
        %398 = vmatprep.subr.bf16.mxu0 0
        %399 = vmatpush1.bf16.xpose.msra.mxu0 0
        %400 = vmatprep.subr.bf16.mxu0 0
        %401 = vmatpush1.bf16.xpose.msra.mxu0 0
        %402 = vmatprep.subr.bf16.mxu0 0
        %403 = vmatpush1.bf16.xpose.msra.mxu0 0
        %404 = vmatprep.subr.bf16.mxu0 0
        %405 = vmatpush1.bf16.xpose.msra.mxu0 0
        %406 = vmatprep.subr.bf16.mxu0 0
        %407 = vmatpush1.bf16.xpose.msra.mxu0 0
        %408 = vmatprep.subr.bf16.mxu0 0
        %409 = vmatpush1.bf16.xpose.msra.mxu0 %v392
        %410 = vmatprep.subr.bf16.mxu0 0
        %411 = vmatpush2.bf16.xpose.msra.mxu0 0
        %412 = vmatprep.subr.bf16.mxu0 0
        %413 = vmatpush2.bf16.xpose.msra.mxu0 0
        %414 = vmatprep.subr.bf16.mxu0 0
        %415 = vmatpush2.bf16.xpose.msra.mxu0 0
        %416 = vmatprep.subr.bf16.mxu0 0
        %417 = vmatpush2.bf16.xpose.msra.mxu0 0
        %418 = vmatprep.subr.bf16.mxu0 0
        %419 = vmatpush2.bf16.xpose.msra.mxu0 0
        %420 = vmatprep.subr.bf16.mxu0 0
        %421 = vmatpush2.bf16.xpose.msra.mxu0 0
        %422 = vmatprep.subr.bf16.mxu0 0
        %423 = vmatpush2.bf16.xpose.msra.mxu0 0
        %424 = vmatprep.subr.bf16.mxu0 0
        %425 = vmatpush2.bf16.xpose.msra.mxu0 0
        %426 = vmatprep.mubr.bf16.mxu0 0
        %427 = vmatmul.mubr.bf16.gmra.mxu0 %v389
        %v428 = vpop.f32.mrf.mxu0
        %v429 = vadd.f32 %v383, %v428
        %v430 = vpop.f32.mrf.mxu0
        %v431 = vpop.f32.mrf.mxu0
        %v432 = vpop.f32.mrf.mxu0
        %433 = vdwg.mxu0
        %v434 = vsel %vm387, %v429, -inf
        %435 = vmax.xlane.f32.xlu0 %v434
        %v436 = vpop.xlane.xlu0 %435
        %v437 = vsub.f32 %v429, %v436
        %v438 = vmul.f32 %v437, 1.442695
        %v439 = vpow.pop %v438
        %v440 = vsel %vm387, %v439, 0.0
        %441 = vadd.xlane.f32.xlu0 %v440
        %v442 = vpop.xlane.xlu0 %441
        %v443 = vrcp.pop %v442
        %v444 = vmul.f32 %v439, %v443
        %v445 = vpack.c.bf16 %v444, %v444
        %446 = vrot.lane.b32.xlu0 %v381, 112
        %v447 = vpop.permute.xlu0 %446
        %v449 = vsel %vm387, %v445, 0
        %vm451 = vcmask 1043456
        %v453 = vsel %vm451, %v447, 0
        %455 = vmatprep.subr.bf16.mxu0 0
        %456 = vmatpush1.bf16.msra.mxu0 0
        %457 = vmatprep.subr.bf16.mxu0 0
        %458 = vmatpush1.bf16.msra.mxu0 0
        %459 = vmatprep.subr.bf16.mxu0 0
        %460 = vmatpush1.bf16.msra.mxu0 0
        %461 = vmatprep.subr.bf16.mxu0 0
        %462 = vmatpush1.bf16.msra.mxu0 0
        %463 = vmatprep.subr.bf16.mxu0 0
        %464 = vmatpush1.bf16.msra.mxu0 0
        %465 = vmatprep.subr.bf16.mxu0 0
        %466 = vmatpush1.bf16.msra.mxu0 0
        %467 = vmatprep.subr.bf16.mxu0 0
        %468 = vmatpush1.bf16.msra.mxu0 0
        %469 = vmatprep.subr.bf16.mxu0 0
        %470 = vmatpush1.bf16.msra.mxu0 %v453
        %471 = vmatprep.subr.bf16.mxu0 0
        %472 = vmatpush2.bf16.msra.mxu0 0
        %473 = vmatprep.subr.bf16.mxu0 0
        %474 = vmatpush2.bf16.msra.mxu0 0
        %475 = vmatprep.subr.bf16.mxu0 0
        %476 = vmatpush2.bf16.msra.mxu0 0
        %477 = vmatprep.subr.bf16.mxu0 0
        %478 = vmatpush2.bf16.msra.mxu0 0
        %479 = vmatprep.subr.bf16.mxu0 0
        %480 = vmatpush2.bf16.msra.mxu0 0
        %481 = vmatprep.subr.bf16.mxu0 0
        %482 = vmatpush2.bf16.msra.mxu0 0
        %483 = vmatprep.subr.bf16.mxu0 0
        %484 = vmatpush2.bf16.msra.mxu0 0
        %485 = vmatprep.subr.bf16.mxu0 0
        %486 = vmatpush2.bf16.msra.mxu0 0
        %487 = vmatprep.mubr.bf16.mxu0 0
        %488 = vmatmul.mubr.bf16.gmra.mxu0 %v449
        %v489 = vpop.f32.mrf.mxu0
        %v490 = vadd.f32 0.0, %v489
        %v491 = vpop.f32.mrf.mxu0
        %v492 = vpop.f32.mrf.mxu0
        %v493 = vpop.f32.mrf.mxu0
        %494 = vdwg.mxu0
        %v495 = vpack.c.bf16 %v490, %v490
        %vm496 = vcmask 60416
        %497 = vst.msk [vmem:[%s284] sm:$0xf] %vm496, %v495
        %498 = vst.msk [vmem:[%s291] sm:$0xff] %vm387, %v444
        %s499 = sand.u32 %s151, 1
        %s500 = scalar_lea.sflag [#allocation3], %s499
        %s501 = sand.u32 %s151, 1
        %s502 = smul.addr %s501, 4
        %s503 = scalar_lea.vmem [#allocation2], %s502
        %s504 = sand.u32 %s179, 1
        %s505 = scalar_lea.sflag [#allocation5], %s504
        %s506 = sand.u32 %s179, 1
        %s507 = smul.addr %s506, 8
        %s508 = scalar_lea.vmem [#allocation4], %s507
        // Predicated region
        $region37: #{tpu_custom_call.1} parent=35 // pred_check
          %p509 = pneg %p161
        $region38: #{tpu_custom_call.1} parent=35 // pred_check_branch
          %511 = sbr.rel (%p509) target = $region40
        $region39: #{tpu_custom_call.1} parent=35 // pred_region
          %s513 = ssub.s32 64, 64
          %514 = vsyncadd %s500, %s513
          %s515 = smul.addr %s27, 4
          %s516 = sadd.s32 %s28, %s515
          %s517 = smul.addr %s516, 64
          %s518 = scalar_lea.hbm %s4, %s517
          %s520 = sshll.u32 %s503, 4
          %s521 = int_to_ptr.vmem [resolvable:$true] %s520
          %523 = dma.vmem_to_hbm [thread:$0]  %s521, 64, %s518, %s500
        $region40: #{tpu_custom_call.1} parent=35 // pred_fallthru
          _
        // Predicated region
        $region41: #{tpu_custom_call.1} parent=35 // pred_check
          %p524 = pneg %p189
        $region42: #{tpu_custom_call.1} parent=35 // pred_check_branch
          %526 = sbr.rel (%p524) target = $region44
        $region43: #{tpu_custom_call.1} parent=35 // pred_region
          %s528 = ssub.s32 128, 128
          %529 = vsyncadd %s505, %s528
          %s530 = smul.addr %s27, 4
          %s531 = sadd.s32 %s28, %s530
          %s532 = smul.addr %s531, 128
          %s533 = scalar_lea.hbm %s5, %s532
          %s535 = sshll.u32 %s508, 4
          %s536 = int_to_ptr.vmem [resolvable:$true] %s535
          %538 = dma.vmem_to_hbm [thread:$0]  %s536, 128, %s533, %s505
        $region44: #{tpu_custom_call.1} parent=35 // pred_fallthru
          _
      $region36: #{tpu_custom_call.1} parent=5 // pred_fallthru
        _
      %p539 = scmp.le.s32.totalorder 2, %s18
      // Predicated region
      $region45: #{tpu_custom_call.1} parent=5 // pred_check
        %p540 = pneg %p539
      $region46: #{tpu_custom_call.1} parent=5 // pred_check_branch
        %542 = sbr.rel (%p540) target = $region48
      $region47: #{tpu_custom_call.1} parent=5 // pred_region
        %s543 = ssub.s32 %s18, 2
        // Predicated region
        $region49: #{tpu_custom_call.1} parent=47 // pred_check
          %p544 = pneg %p167
        $region50: #{tpu_custom_call.1} parent=47 // pred_check_branch
          %546 = sbr.rel (%p544) target = $region52
        $region51: #{tpu_custom_call.1} parent=47 // pred_region
          %s547 = sand.u32 %s152, 1
          %s548 = scalar_lea.sflag [#allocation3], %s547
          %s549 = sand.u32 %s152, 1
          %s550 = smul.addr %s549, 4
          %s551 = scalar_lea.vmem [#allocation2], %s550
          %552 = dma.done %s548, 64
        $region52: #{tpu_custom_call.1} parent=47 // pred_fallthru
          _
        // Predicated region
        $region53: #{tpu_custom_call.1} parent=47 // pred_check
          %p553 = pneg %p195
        $region54: #{tpu_custom_call.1} parent=47 // pred_check_branch
          %555 = sbr.rel (%p553) target = $region56
        $region55: #{tpu_custom_call.1} parent=47 // pred_region
          %s556 = sand.u32 %s180, 1
          %s557 = scalar_lea.sflag [#allocation5], %s556
          %s558 = sand.u32 %s180, 1
          %s559 = smul.addr %s558, 8
          %s560 = scalar_lea.vmem [#allocation4], %s559
          %561 = dma.done %s557, 128
        $region56: #{tpu_custom_call.1} parent=47 // pred_fallthru
          _
      $region48: #{tpu_custom_call.1} parent=5 // pred_fallthru
        _
    $region6: #{tpu_custom_call.1} parent=1 // loop_footer
      %s22 = sadd.s32 1, %s18
    $region7: #{tpu_custom_call.1} parent=1 // loop_footer_branch
      %17 = sbr.rel target = $region3
    $region8: #{tpu_custom_call.1} parent=1 // loop_exit
      _
    %562 = vsyncpa [#allocation3], 1
    %s563 = scalar_lea.sflag [#allocation3], 1
    %564 = vsyncpa %s563, 1
    %565 = vsyncpa [#allocation5], 1
    %s566 = scalar_lea.sflag [#allocation5], 1
    %567 = vsyncpa %s566, 1

</llo_original>
